<compile_context>
chip_gen: v5e
topology: v5e:2x2
jax: 0.10.0
libtpu: 0.0.40
codegen_flags: <defaults>
</compile_context>

<pallas_src>
import functools
import math

import jax
import jax.numpy as jnp
from jax.experimental import pallas as pl
from jax.experimental.pallas import tpu as pltpu


def _serialnet_kernel(x_ref, wo_ref, bo_ref, ws_ref, bs_ref, wc_ref, bc_ref,
                      o_ref, *, local_steps):
    # x_ref : (TM, 2)    input coordinates (t, x) per point, sample-major
    # wo_ref: (C, 2)     open-layer weight (torch layout: out x in)
    # bo_ref: (C, 1)     open-layer bias
    # ws_ref: (L, C, C)  stacked step-layer weights, pre-scaled by dt
    # bs_ref: (L, C, 1)  stacked step-layer biases,  pre-scaled by dt
    # wc_ref: (C, 1)     close-layer weight, transposed
    # bc_ref: (1, 1)     close-layer bias
    # o_ref : (1, TM)    output, lane-dense (N on the 128-lane axis)

    # Open layer: Linear(2, C) + ReLU.  Expressed as a dot_general contracting
    # the last dims of (C,2) and (TM,2) -> (C, TM); the compiler performs the
    # tiny (TM,2)->(2,TM) relayout (XLU/MXU have plenty of slack at C=16).
    h = jax.lax.dot_general(
        wo_ref[...], x_ref[...],
        dimension_numbers=(((1,), (1,)), ((), ())),
        preferred_element_type=jnp.float32) + bo_ref[...]          # (C, TM)
    h = jnp.maximum(h, 0.0)

    # Serial part (torchbraid LayerParallel -> buildSequentialOnRoot):
    # forward-Euler residual steps  h <- h + dt * ReLU(W_k h + b_k).
    # dt (> 0) is folded into W_k, b_k in the wrapper, so each step is
    # h <- h + ReLU((dt W_k) h + dt b_k), saving one (C, TM) VPU multiply.
    # TODO(synk): this encodes torchbraid's ODE-step composition of the
    # StepLayers; the bare StepLayer.forward alone is just ReLU(W_k h + b_k).
    # TODO(synk): if local_steps grows beyond ~16, switch this static unroll to
    # lax.fori_loop with dynamic ws_ref[k]/bs_ref[k] indexing (vreg pressure).
    for k in range(local_steps):
        z = jnp.dot(ws_ref[k], h, preferred_element_type=jnp.float32) + bs_ref[k]
        h = h + jnp.maximum(z, 0.0)

    # Close layer: Linear(C, 1) as VPU multiply + sublane reduction -> (1, TM),
    # stored as one long unmasked lane-dense vst.
    y = jnp.sum(wc_ref[...] * h, axis=0, keepdims=True) + bc_ref[...]
    o_ref[...] = y.astype(o_ref.dtype)


def _pick_tile_n(n):
    """Largest lane-dense tile (multiple of 128, <=1024 for vreg pressure) that
    still leaves ~8 grid steps for pipelining / v7x megacore sharding."""
    tile = 128 * pl.cdiv(n, 128 * 8)
    return int(max(128, min(1024, tile)))


def serialnet_forward(x, params, *, tf=1.0, tile_n=None):
    """Fused Pallas forward of SerialNet.

    x: (N, 2) float32
    params: (w_open (C,2), b_open (C,), w_steps (L,C,C), b_steps (L,C),
             w_close (1,C), b_close (1,))
    returns: (N, 1) float32
    """
    w_open, b_open, w_steps, b_steps, w_close, b_close = params
    n = x.shape[0]
    c = w_open.shape[0]
    local_steps = w_steps.shape[0]
    dt = float(tf) / float(local_steps)

    if tile_n is None:
        tile_n = _pick_tile_n(n)
    grid_n = pl.cdiv(n, tile_n)

    # x is consumed directly (no transpose / zero-pad HBM pass); ragged last
    # tile is handled by Pallas partial blocks (OOB writes are masked off).
    x = x.astype(jnp.float32)                                      # (N, 2)
    wo = w_open.astype(jnp.float32)                                # (C, 2)
    bo = b_open.reshape(c, 1).astype(jnp.float32)                  # (C, 1)
    # Fold dt into the step weights/biases (dt > 0, so ReLU commutes with it).
    ws = (dt * w_steps).astype(jnp.float32)                        # (L, C, C)
    bs = (dt * b_steps).reshape(local_steps, c, 1).astype(jnp.float32)
    wc_t = w_close.reshape(1, c).T.astype(jnp.float32)             # (C, 1)
    bc = b_close.reshape(1, 1).astype(jnp.float32)                 # (1, 1)

    kernel = functools.partial(_serialnet_kernel, local_steps=local_steps)

    out = pl.pallas_call(
        kernel,
        out_shape=jax.ShapeDtypeStruct((1, n), jnp.float32),
        grid_spec=pltpu.PrefetchScalarGridSpec(
            num_scalar_prefetch=0,
            grid=(grid_n,),
            in_specs=[
                pl.BlockSpec((tile_n, 2), lambda i: (i, 0)),            # x
                pl.BlockSpec((c, 2), lambda i: (0, 0)),                 # w_open
                pl.BlockSpec((c, 1), lambda i: (0, 0)),                 # b_open
                pl.BlockSpec((local_steps, c, c), lambda i: (0, 0, 0)), # dt*w_steps
                pl.BlockSpec((local_steps, c, 1), lambda i: (0, 0, 0)), # dt*b_steps
                pl.BlockSpec((c, 1), lambda i: (0, 0)),                 # w_close^T
                pl.BlockSpec((1, 1), lambda i: (0, 0)),                 # b_close
            ],
            out_specs=pl.BlockSpec((1, tile_n), lambda i: (0, i)),
        ),
        compiler_params=pltpu.CompilerParams(
            dimension_semantics=("parallel",),
        ),
    )(x, wo, bo, ws, bs, wc_t, bc)

    # (1, N) -> (N, 1): same row-major data, free reshape.
    return out.reshape(n, 1)


def init_serialnet_params(key, channels, local_steps):
    """Deterministic init mirroring nn.Linear's default uniform(+/- 1/sqrt(fan_in))."""
    def linear_init(k, out_f, in_f):
        bound = 1.0 / math.sqrt(in_f)
        kw, kb = jax.random.split(k)
        w = jax.random.uniform(kw, (out_f, in_f), jnp.float32, -bound, bound)
        b = jax.random.uniform(kb, (out_f,), jnp.float32, -bound, bound)
        return w, b

    keys = jax.random.split(key, local_steps + 2)
    w_open, b_open = linear_init(keys[0], channels, 2)
    step_ws, step_bs = [], []
    for k in range(local_steps):
        w, b = linear_init(keys[1 + k], channels, channels)
        step_ws.append(w)
        step_bs.append(b)
    w_steps = jnp.stack(step_ws)
    b_steps = jnp.stack(step_bs)
    w_close, b_close = linear_init(keys[-1], 1, channels)
    return w_open, b_open, w_steps, b_steps, w_close, b_close


def serialnet_reference(x, params, *, tf=1.0):
    """Plain-JAX reference with the same math (sample-major (N, C) layout)."""
    w_open, b_open, w_steps, b_steps, w_close, b_close = params
    local_steps = w_steps.shape[0]
    dt = float(tf) / float(local_steps)
    h = jnp.maximum(x @ w_open.T + b_open, 0.0)
    for k in range(local_steps):
        h = h + dt * jnp.maximum(h @ w_steps[k].T + b_steps[k], 0.0)
    return h @ w_close.T + b_close


if __name__ == "__main__":
    key = jax.random.PRNGKey(0)
    k_param, k_x = jax.random.split(key)

    channels = 16
    local_steps = 4
    tf = 1.0
    n = 1000          # not a multiple of the tile -> exercises ragged last block

    params = init_serialnet_params(k_param, channels, local_steps)
    x = jax.random.normal(k_x, (n, 2), dtype=jnp.float32)

    out = serialnet_forward(x, params, tf=tf)
    out = jax.block_until_ready(out)

    ref = serialnet_reference(x, params, tf=tf)
    assert out.shape == (n, 1)
    assert jnp.allclose(out, ref, atol=1e-4, rtol=1e-4), float(
        jnp.max(jnp.abs(out - ref)))

    print("KERNEL_OK")
</pallas_src>

<mosaic_0001>
module attributes {stable_mosaic.version = 11 : i64} {
  func.func @_serialnet_kernel(%arg0: i32, %arg1: memref<128x2xf32, #tpu.memory_space<vmem>>, %arg2: memref<16x2xf32, #tpu.memory_space<vmem>>, %arg3: memref<16x1xf32, #tpu.memory_space<vmem>>, %arg4: memref<4x16x16xf32, #tpu.memory_space<vmem>>, %arg5: memref<4x16x1xf32, #tpu.memory_space<vmem>>, %arg6: memref<16x1xf32, #tpu.memory_space<vmem>>, %arg7: memref<1x1xf32, #tpu.memory_space<vmem>>, %arg8: memref<1x128xf32, #tpu.memory_space<vmem>>) attributes {dimension_semantics = [#tpu.dimension_semantics<parallel>], iteration_bounds = array<i64: 8>, scalar_prefetch = 0 : i64, scratch_operands = 0 : i64, tpu.core_type = #tpu.core_type<tc>, window_params = [{transform_indices = @transform_0, window_bounds = array<i64: 128, 2>}, {pipeline_mode = #tpu.pipeline_mode<synchronous>, transform_indices = @transform_1, window_bounds = array<i64: 16, 2>}, {pipeline_mode = #tpu.pipeline_mode<synchronous>, transform_indices = @transform_2, window_bounds = array<i64: 16, 1>}, {pipeline_mode = #tpu.pipeline_mode<synchronous>, transform_indices = @transform_3, window_bounds = array<i64: 4, 16, 16>}, {pipeline_mode = #tpu.pipeline_mode<synchronous>, transform_indices = @transform_4, window_bounds = array<i64: 4, 16, 1>}, {pipeline_mode = #tpu.pipeline_mode<synchronous>, transform_indices = @transform_5, window_bounds = array<i64: 16, 1>}, {pipeline_mode = #tpu.pipeline_mode<synchronous>, transform_indices = @transform_6, window_bounds = array<i64: 1, 1>}, {transform_indices = @transform_7, window_bounds = array<i64: 1, 128>}]} {
    %c0 = arith.constant 0 : index
    %c0_0 = arith.constant 0 : index
    %0 = vector.load %arg2[%c0, %c0_0] : memref<16x2xf32, #tpu.memory_space<vmem>>, vector<16x2xf32>
    %c0_1 = arith.constant 0 : index
    %c0_2 = arith.constant 0 : index
    %1 = vector.load %arg1[%c0_1, %c0_2] : memref<128x2xf32, #tpu.memory_space<vmem>>, vector<128x2xf32>
    %cst = arith.constant dense<0.000000e+00> : vector<16x128xf32>
    %2 = tpu.matmul %0, %1, %cst {dimension_numbers = #tpu.dot_dimension_numbers<[1], [1], [0], [0], [0, 0, 1, 0], [], []>} : vector<16x2xf32>, vector<128x2xf32>, vector<16x128xf32> -> vector<16x128xf32>
    %c0_3 = arith.constant 0 : index
    %c0_4 = arith.constant 0 : index
    %3 = vector.load %arg3[%c0_3, %c0_4] : memref<16x1xf32, #tpu.memory_space<vmem>>, vector<16x1xf32>
    %4 = vector.broadcast %3 : vector<16x1xf32> to vector<16x128xf32>
    %5 = arith.addf %2, %4 : vector<16x128xf32>
    %cst_5 = arith.constant 0.000000e+00 : f32
    %6 = vector.broadcast %cst_5 : f32 to vector<16x128xf32>
    %7 = arith.maximumf %5, %6 : vector<16x128xf32>
    %c0_6 = arith.constant 0 : index
    %c0_7 = arith.constant 0 : index
    %c0_8 = arith.constant 0 : index
    %8 = vector.load %arg4[%c0_6, %c0_7, %c0_8] : memref<4x16x16xf32, #tpu.memory_space<vmem>>, vector<1x16x16xf32>
    %9 = vector.shape_cast %8 : vector<1x16x16xf32> to vector<16x16xf32>
    %cst_9 = arith.constant dense<0.000000e+00> : vector<16x128xf32>
    %10 = tpu.matmul %9, %7, %cst_9 {dimension_numbers = #tpu.dot_dimension_numbers<[1], [0], [0], [1], [0, 0, 1, 1], [], []>} : vector<16x16xf32>, vector<16x128xf32>, vector<16x128xf32> -> vector<16x128xf32>
    %c0_10 = arith.constant 0 : index
    %c0_11 = arith.constant 0 : index
    %c0_12 = arith.constant 0 : index
    %11 = vector.load %arg5[%c0_10, %c0_11, %c0_12] : memref<4x16x1xf32, #tpu.memory_space<vmem>>, vector<1x16x1xf32>
    %12 = vector.shape_cast %11 : vector<1x16x1xf32> to vector<16x1xf32>
    %13 = vector.broadcast %12 : vector<16x1xf32> to vector<16x128xf32>
    %14 = arith.addf %10, %13 : vector<16x128xf32>
    %cst_13 = arith.constant 0.000000e+00 : f32
    %15 = vector.broadcast %cst_13 : f32 to vector<16x128xf32>
    %16 = arith.maximumf %14, %15 : vector<16x128xf32>
    %17 = arith.addf %7, %16 : vector<16x128xf32>
    %c1 = arith.constant 1 : index
    %c0_14 = arith.constant 0 : index
    %c0_15 = arith.constant 0 : index
    %18 = vector.load %arg4[%c1, %c0_14, %c0_15] : memref<4x16x16xf32, #tpu.memory_space<vmem>>, vector<1x16x16xf32>
    %19 = vector.shape_cast %18 : vector<1x16x16xf32> to vector<16x16xf32>
    %cst_16 = arith.constant dense<0.000000e+00> : vector<16x128xf32>
    %20 = tpu.matmul %19, %17, %cst_16 {dimension_numbers = #tpu.dot_dimension_numbers<[1], [0], [0], [1], [0, 0, 1, 1], [], []>} : vector<16x16xf32>, vector<16x128xf32>, vector<16x128xf32> -> vector<16x128xf32>
    %c1_17 = arith.constant 1 : index
    %c0_18 = arith.constant 0 : index
    %c0_19 = arith.constant 0 : index
    %21 = vector.load %arg5[%c1_17, %c0_18, %c0_19] : memref<4x16x1xf32, #tpu.memory_space<vmem>>, vector<1x16x1xf32>
    %22 = vector.shape_cast %21 : vector<1x16x1xf32> to vector<16x1xf32>
    %23 = vector.broadcast %22 : vector<16x1xf32> to vector<16x128xf32>
    %24 = arith.addf %20, %23 : vector<16x128xf32>
    %cst_20 = arith.constant 0.000000e+00 : f32
    %25 = vector.broadcast %cst_20 : f32 to vector<16x128xf32>
    %26 = arith.maximumf %24, %25 : vector<16x128xf32>
    %27 = arith.addf %17, %26 : vector<16x128xf32>
    %c2 = arith.constant 2 : index
    %c0_21 = arith.constant 0 : index
    %c0_22 = arith.constant 0 : index
    %28 = vector.load %arg4[%c2, %c0_21, %c0_22] : memref<4x16x16xf32, #tpu.memory_space<vmem>>, vector<1x16x16xf32>
    %29 = vector.shape_cast %28 : vector<1x16x16xf32> to vector<16x16xf32>
    %cst_23 = arith.constant dense<0.000000e+00> : vector<16x128xf32>
    %30 = tpu.matmul %29, %27, %cst_23 {dimension_numbers = #tpu.dot_dimension_numbers<[1], [0], [0], [1], [0, 0, 1, 1], [], []>} : vector<16x16xf32>, vector<16x128xf32>, vector<16x128xf32> -> vector<16x128xf32>
    %c2_24 = arith.constant 2 : index
    %c0_25 = arith.constant 0 : index
    %c0_26 = arith.constant 0 : index
    %31 = vector.load %arg5[%c2_24, %c0_25, %c0_26] : memref<4x16x1xf32, #tpu.memory_space<vmem>>, vector<1x16x1xf32>
    %32 = vector.shape_cast %31 : vector<1x16x1xf32> to vector<16x1xf32>
    %33 = vector.broadcast %32 : vector<16x1xf32> to vector<16x128xf32>
    %34 = arith.addf %30, %33 : vector<16x128xf32>
    %cst_27 = arith.constant 0.000000e+00 : f32
    %35 = vector.broadcast %cst_27 : f32 to vector<16x128xf32>
    %36 = arith.maximumf %34, %35 : vector<16x128xf32>
    %37 = arith.addf %27, %36 : vector<16x128xf32>
    %c3 = arith.constant 3 : index
    %c0_28 = arith.constant 0 : index
    %c0_29 = arith.constant 0 : index
    %38 = vector.load %arg4[%c3, %c0_28, %c0_29] : memref<4x16x16xf32, #tpu.memory_space<vmem>>, vector<1x16x16xf32>
    %39 = vector.shape_cast %38 : vector<1x16x16xf32> to vector<16x16xf32>
    %cst_30 = arith.constant dense<0.000000e+00> : vector<16x128xf32>
    %40 = tpu.matmul %39, %37, %cst_30 {dimension_numbers = #tpu.dot_dimension_numbers<[1], [0], [0], [1], [0, 0, 1, 1], [], []>} : vector<16x16xf32>, vector<16x128xf32>, vector<16x128xf32> -> vector<16x128xf32>
    %c3_31 = arith.constant 3 : index
    %c0_32 = arith.constant 0 : index
    %c0_33 = arith.constant 0 : index
    %41 = vector.load %arg5[%c3_31, %c0_32, %c0_33] : memref<4x16x1xf32, #tpu.memory_space<vmem>>, vector<1x16x1xf32>
    %42 = vector.shape_cast %41 : vector<1x16x1xf32> to vector<16x1xf32>
    %43 = vector.broadcast %42 : vector<16x1xf32> to vector<16x128xf32>
    %44 = arith.addf %40, %43 : vector<16x128xf32>
    %cst_34 = arith.constant 0.000000e+00 : f32
    %45 = vector.broadcast %cst_34 : f32 to vector<16x128xf32>
    %46 = arith.maximumf %44, %45 : vector<16x128xf32>
    %47 = arith.addf %37, %46 : vector<16x128xf32>
    %c0_35 = arith.constant 0 : index
    %c0_36 = arith.constant 0 : index
    %48 = vector.load %arg6[%c0_35, %c0_36] : memref<16x1xf32, #tpu.memory_space<vmem>>, vector<16x1xf32>
    %49 = vector.broadcast %48 : vector<16x1xf32> to vector<16x128xf32>
    %50 = arith.mulf %49, %47 : vector<16x128xf32>
    %cst_37 = arith.constant dense<0.000000e+00> : vector<128xf32>
    %51 = vector.multi_reduction <add>, %50, %cst_37 [0] : vector<16x128xf32> to vector<128xf32>
    %52 = vector.shape_cast %51 : vector<128xf32> to vector<1x128xf32>
    %c0_38 = arith.constant 0 : index
    %c0_39 = arith.constant 0 : index
    %53 = vector.load %arg7[%c0_38, %c0_39] : memref<1x1xf32, #tpu.memory_space<vmem>>, vector<1x1xf32>
    %54 = vector.broadcast %53 : vector<1x1xf32> to vector<1x128xf32>
    %55 = arith.addf %52, %54 : vector<1x128xf32>
    %c0_40 = arith.constant 0 : index
    %c0_41 = arith.constant 0 : index
    %56 = vector.load %arg8[%c0_40, %c0_41] : memref<1x128xf32, #tpu.memory_space<vmem>>, vector<1x128xf32>
    tpu.vector_store %arg8[%c0_40, %c0_41], %55 {strides = array<i32>} : memref<1x128xf32, #tpu.memory_space<vmem>>, vector<1x128xf32>,
    return
  }
  func.func @transform_0(%arg0: i32) -> (i32, i32) {
    %c0_i32 = arith.constant 0 : i32
    %c0_i32_0 = arith.constant 0 : i32
    return %arg0, %c0_i32 : i32, i32
  }
  func.func @transform_1(%arg0: i32) -> (i32, i32) {
    %c0_i32 = arith.constant 0 : i32
    %c0_i32_0 = arith.constant 0 : i32
    %c0_i32_1 = arith.constant 0 : i32
    return %c0_i32, %c0_i32_0 : i32, i32
  }
  func.func @transform_2(%arg0: i32) -> (i32, i32) {
    %c0_i32 = arith.constant 0 : i32
    %c0_i32_0 = arith.constant 0 : i32
    %c0_i32_1 = arith.constant 0 : i32
    return %c0_i32, %c0_i32_0 : i32, i32
  }
  func.func @transform_3(%arg0: i32) -> (i32, i32, i32) {
    %c0_i32 = arith.constant 0 : i32
    %c0_i32_0 = arith.constant 0 : i32
    %c0_i32_1 = arith.constant 0 : i32
    %c0_i32_2 = arith.constant 0 : i32
    return %c0_i32, %c0_i32_0, %c0_i32_1 : i32, i32, i32
  }
  func.func @transform_4(%arg0: i32) -> (i32, i32, i32) {
    %c0_i32 = arith.constant 0 : i32
    %c0_i32_0 = arith.constant 0 : i32
    %c0_i32_1 = arith.constant 0 : i32
    %c0_i32_2 = arith.constant 0 : i32
    return %c0_i32, %c0_i32_0, %c0_i32_1 : i32, i32, i32
  }
  func.func @transform_5(%arg0: i32) -> (i32, i32) {
    %c0_i32 = arith.constant 0 : i32
    %c0_i32_0 = arith.constant 0 : i32
    %c0_i32_1 = arith.constant 0 : i32
    return %c0_i32, %c0_i32_0 : i32, i32
  }
  func.func @transform_6(%arg0: i32) -> (i32, i32) {
    %c0_i32 = arith.constant 0 : i32
    %c0_i32_0 = arith.constant 0 : i32
    %c0_i32_1 = arith.constant 0 : i32
    return %c0_i32, %c0_i32_0 : i32, i32
  }
  func.func @transform_7(%arg0: i32) -> (i32, i32) {
    %c0_i32 = arith.constant 0 : i32
    %c0_i32_0 = arith.constant 0 : i32
    return %c0_i32, %arg0 : i32, i32
  }
}

</mosaic_0001>

<llo_original>
// kernel: tpu_custom_call.1
$region0: #{tpu_custom_call.1}
  #allocation0 [shape = 'u32[]', space=smem, size = 0x4, offset = 0x4, fixed_abs, tag = 'smem constant byte address 0x4 - core index']
  #allocation1 [shape = 'u32[72,128]{1,0:T(1,128)}', space=vmem, size = 0x9000, scoped, tag = 'internal scratch']
  #allocation2 [shape = 'f32[1,1]{1,0:T(1,128)S(1)}', space=vmem, size = 0x200, scoped, tag = 'scoped memory for tpu_custom_call.1']
  %s0 = inlined_call_operand.vmem [shape: f32[1000,2], index: 0, kind: input, shape index: {}]
  %s1 = inlined_call_operand.vmem [shape: f32[16,2], index: 1, kind: input, shape index: {}]
  %s2 = inlined_call_operand.vmem [shape: f32[16,1], index: 2, kind: input, shape index: {}]
  %s3 = inlined_call_operand.vmem [shape: f32[4,16,16], index: 3, kind: input, shape index: {}]
  %s4 = inlined_call_operand.vmem [shape: f32[4,16,1], index: 4, kind: input, shape index: {}]
  %s5 = inlined_call_operand.vmem [shape: f32[16,1], index: 5, kind: input, shape index: {}]
  %s6 = inlined_call_operand.<no memory space> [shape: f32[1,1], index: 6, kind: input, shape index: {}]
  %s7 = inlined_call_operand.hbm [shape: f32[1,1000], index: 7, kind: output, shape index: {}]
  %s8 = sld [smem:[#allocation0]]
  $region61: #{tpu_custom_call.1} parent=0
    _
  %s10 = ssub.s32 1, %s8
  %s11 = scalar_select 0, %s10, %s8
  %v12 = vstv %s6
  %13 = vst [vmem:[#allocation2] sm:$0x1] %v12
  $region1: #{tpu_custom_call.1} parent=0
    #allocation3 [shape = 'u8[1024]{0}', space=vmem, size = 0x400, scoped, tag = 'output window, operand 0']
    #allocation4 [shape = 's32[2]{0}', space=sflag, size = 0x8, scoped, tag = 'scoped memory for tpu_custom_call.1']
    %14 = vsyncpa [#allocation4], 0
    %s15 = scalar_lea.sflag [#allocation4], 1
    %16 = vsyncpa %s15, 0
    loop: start=0, step=1, limit=10
    $region2: #{tpu_custom_call.1} parent=1 // loop_pre_header
      _
    $region3: #{tpu_custom_call.1} parent=1 // loop_header
      %s18 = sphi 0, %s22
      %p19 = scmp.ge.s32.totalorder %s18, 10
      %s28 = sphi 0, %s30
      %s31 = sphi 0, %s28
      %s32 = sphi 0, %s31
      %s48 = sphi 0, %s32
      %s52 = sphi 0, %s52
      %s54 = sphi 0, %s52
      %s55 = sphi 0, %s54
      %s69 = sphi 0, %s55
      %s73 = sphi 0, %s73
      %s75 = sphi 0, %s73
      %s76 = sphi 0, %s75
      %s90 = sphi 0, %s76
      %s94 = sphi 0, %s94
      %s96 = sphi 0, %s94
      %s97 = sphi 0, %s96
      %s111 = sphi 0, %s97
      %s115 = sphi 0, %s115
      %s117 = sphi 0, %s115
      %s118 = sphi 0, %s117
      %s132 = sphi 0, %s118
      %s136 = sphi 0, %s136
      %s138 = sphi 0, %s136
      %s139 = sphi 0, %s138
      %s153 = sphi 0, %s139
      %s157 = sphi 0, %s157
      %s159 = sphi 0, %s157
      %s160 = sphi 0, %s159
      %s174 = sphi 0, %s160
      %s180 = sphi 0, %s182
      %s183 = sphi 0, %s180
      %s184 = sphi 0, %s183
      %s200 = sphi 0, %s184
    $region4: #{tpu_custom_call.1} parent=1 // loop_header_branch
      %21 = sbr.rel (%p19) target = $region8
    $region5: #{tpu_custom_call.1} parent=1 // loop_body
      %s23 = ssub.s32 %s18, 1
      %s24 = ssub.s32 %s18, 2
      %s25 = sadd.s32 %s18, 1
      %s26 = ssub.s32 %s18, %s25
      %p27 = scmp.eq.s32.totalorder %s26, 0
      %s29 = sadd.s32 %s28, 1
      %s30 = scalar_select %p27, %s28, %s29
      %p33 = pneg %p27
      %p34 = scmp.eq.s32.totalorder %s18, 7
      %p35 = por %p33, %p34
      %p36 = scmp.ne.s32.totalorder %s28, %s31
      %p37 = scmp.eq.s32.totalorder %s18, 0
      %p38 = por %p36, %p37
      %p39 = scmp.ne.s32.totalorder %s28, %s31
      %p40 = scmp.eq.s32.totalorder %s23, 7
      %p41 = por %p39, %p40
      %p42 = scmp.ne.s32.totalorder %s31, %s32
      %p43 = scmp.eq.s32.totalorder %s23, 0
      %p44 = por %p42, %p43
      %p45 = scmp.ne.s32.totalorder %s31, %s32
      %p46 = scmp.eq.s32.totalorder %s24, 7
      %p47 = por %p45, %p46
      %p49 = scmp.ne.s32.totalorder %s32, %s48
      %p50 = scmp.eq.s32.totalorder %s24, 0
      %p51 = por %p49, %p50
      %s53 = sadd.s32 %s52, 1
      %p56 = scmp.eq.s32.totalorder %s18, 7
      %p57 = scmp.ne.s32.totalorder %s52, %s54
      %p58 = scmp.eq.s32.totalorder %s18, 0
      %p59 = por %p57, %p58
      %p60 = scmp.ne.s32.totalorder %s52, %s54
      %p61 = scmp.eq.s32.totalorder %s23, 7
      %p62 = por %p60, %p61
      %p63 = scmp.ne.s32.totalorder %s54, %s55
      %p64 = scmp.eq.s32.totalorder %s23, 0
      %p65 = por %p63, %p64
      %p66 = scmp.ne.s32.totalorder %s54, %s55
      %p67 = scmp.eq.s32.totalorder %s24, 7
      %p68 = por %p66, %p67
      %p70 = scmp.ne.s32.totalorder %s55, %s69
      %p71 = scmp.eq.s32.totalorder %s24, 0
      %p72 = por %p70, %p71
      %s74 = sadd.s32 %s73, 1
      %p77 = scmp.eq.s32.totalorder %s18, 7
      %p78 = scmp.ne.s32.totalorder %s73, %s75
      %p79 = scmp.eq.s32.totalorder %s18, 0
      %p80 = por %p78, %p79
      %p81 = scmp.ne.s32.totalorder %s73, %s75
      %p82 = scmp.eq.s32.totalorder %s23, 7
      %p83 = por %p81, %p82
      %p84 = scmp.ne.s32.totalorder %s75, %s76
      %p85 = scmp.eq.s32.totalorder %s23, 0
      %p86 = por %p84, %p85
      %p87 = scmp.ne.s32.totalorder %s75, %s76
      %p88 = scmp.eq.s32.totalorder %s24, 7
      %p89 = por %p87, %p88
      %p91 = scmp.ne.s32.totalorder %s76, %s90
      %p92 = scmp.eq.s32.totalorder %s24, 0
      %p93 = por %p91, %p92
      %s95 = sadd.s32 %s94, 1
      %p98 = scmp.eq.s32.totalorder %s18, 7
      %p99 = scmp.ne.s32.totalorder %s94, %s96
      %p100 = scmp.eq.s32.totalorder %s18, 0
      %p101 = por %p99, %p100
      %p102 = scmp.ne.s32.totalorder %s94, %s96
      %p103 = scmp.eq.s32.totalorder %s23, 7
      %p104 = por %p102, %p103
      %p105 = scmp.ne.s32.totalorder %s96, %s97
      %p106 = scmp.eq.s32.totalorder %s23, 0
      %p107 = por %p105, %p106
      %p108 = scmp.ne.s32.totalorder %s96, %s97
      %p109 = scmp.eq.s32.totalorder %s24, 7
      %p110 = por %p108, %p109
      %p112 = scmp.ne.s32.totalorder %s97, %s111
      %p113 = scmp.eq.s32.totalorder %s24, 0
      %p114 = por %p112, %p113
      %s116 = sadd.s32 %s115, 1
      %p119 = scmp.eq.s32.totalorder %s18, 7
      %p120 = scmp.ne.s32.totalorder %s115, %s117
      %p121 = scmp.eq.s32.totalorder %s18, 0
      %p122 = por %p120, %p121
      %p123 = scmp.ne.s32.totalorder %s115, %s117
      %p124 = scmp.eq.s32.totalorder %s23, 7
      %p125 = por %p123, %p124
      %p126 = scmp.ne.s32.totalorder %s117, %s118
      %p127 = scmp.eq.s32.totalorder %s23, 0
      %p128 = por %p126, %p127
      %p129 = scmp.ne.s32.totalorder %s117, %s118
      %p130 = scmp.eq.s32.totalorder %s24, 7
      %p131 = por %p129, %p130
      %p133 = scmp.ne.s32.totalorder %s118, %s132
      %p134 = scmp.eq.s32.totalorder %s24, 0
      %p135 = por %p133, %p134
      %s137 = sadd.s32 %s136, 1
      %p140 = scmp.eq.s32.totalorder %s18, 7
      %p141 = scmp.ne.s32.totalorder %s136, %s138
      %p142 = scmp.eq.s32.totalorder %s18, 0
      %p143 = por %p141, %p142
      %p144 = scmp.ne.s32.totalorder %s136, %s138
      %p145 = scmp.eq.s32.totalorder %s23, 7
      %p146 = por %p144, %p145
      %p147 = scmp.ne.s32.totalorder %s138, %s139
      %p148 = scmp.eq.s32.totalorder %s23, 0
      %p149 = por %p147, %p148
      %p150 = scmp.ne.s32.totalorder %s138, %s139
      %p151 = scmp.eq.s32.totalorder %s24, 7
      %p152 = por %p150, %p151
      %p154 = scmp.ne.s32.totalorder %s139, %s153
      %p155 = scmp.eq.s32.totalorder %s24, 0
      %p156 = por %p154, %p155
      %s158 = sadd.s32 %s157, 1
      %p161 = scmp.eq.s32.totalorder %s18, 7
      %p162 = scmp.ne.s32.totalorder %s157, %s159
      %p163 = scmp.eq.s32.totalorder %s18, 0
      %p164 = por %p162, %p163
      %p165 = scmp.ne.s32.totalorder %s157, %s159
      %p166 = scmp.eq.s32.totalorder %s23, 7
      %p167 = por %p165, %p166
      %p168 = scmp.ne.s32.totalorder %s159, %s160
      %p169 = scmp.eq.s32.totalorder %s23, 0
      %p170 = por %p168, %p169
      %p171 = scmp.ne.s32.totalorder %s159, %s160
      %p172 = scmp.eq.s32.totalorder %s24, 7
      %p173 = por %p171, %p172
      %p175 = scmp.ne.s32.totalorder %s160, %s174
      %p176 = scmp.eq.s32.totalorder %s24, 0
      %p177 = por %p175, %p176
      %s178 = ssub.s32 %s18, %s25
      %p179 = scmp.eq.s32.totalorder %s178, 0
      %s181 = sadd.s32 %s180, 1
      %s182 = scalar_select %p179, %s180, %s181
      %p185 = pneg %p179
      %p186 = scmp.eq.s32.totalorder %s18, 7
      %p187 = por %p185, %p186
      %p188 = scmp.ne.s32.totalorder %s180, %s183
      %p189 = scmp.eq.s32.totalorder %s18, 0
      %p190 = por %p188, %p189
      %p191 = scmp.ne.s32.totalorder %s180, %s183
      %p192 = scmp.eq.s32.totalorder %s23, 7
      %p193 = por %p191, %p192
      %p194 = scmp.ne.s32.totalorder %s183, %s184
      %p195 = scmp.eq.s32.totalorder %s23, 0
      %p196 = por %p194, %p195
      %p197 = scmp.ne.s32.totalorder %s183, %s184
      %p198 = scmp.eq.s32.totalorder %s24, 7
      %p199 = por %p197, %p198
      %p201 = scmp.ne.s32.totalorder %s184, %s200
      %p202 = scmp.eq.s32.totalorder %s24, 0
      %p203 = por %p201, %p202
      %p204 = scmp.le.s32.totalorder 1, %s18
      %p205 = scmp.lt.s32.totalorder %s18, 9
      %p206 = pnand %p204, %p205
      %p207 = pneg %p206
      // Predicated region
      $region9: #{tpu_custom_call.1} parent=5 // pred_check
        _
      $region10: #{tpu_custom_call.1} parent=5 // pred_check_branch
        %209 = sbr.rel (%p206) target = $region12
      $region11: #{tpu_custom_call.1} parent=5 // pred_region
        %s210 = ssub.s32 %s18, 1
        // Predicated region
        $region13: #{tpu_custom_call.1} parent=11 // pred_check
          %p211 = pneg %p65
        $region14: #{tpu_custom_call.1} parent=11 // pred_check_branch
          %213 = sbr.rel (%p211) target = $region16
        $region15: #{tpu_custom_call.1} parent=11 // pred_region
          _
        $region16: #{tpu_custom_call.1} parent=11 // pred_fallthru
          _
        // Predicated region
        $region17: #{tpu_custom_call.1} parent=11 // pred_check
          %p214 = pneg %p86
        $region18: #{tpu_custom_call.1} parent=11 // pred_check_branch
          %216 = sbr.rel (%p214) target = $region20
        $region19: #{tpu_custom_call.1} parent=11 // pred_region
          _
        $region20: #{tpu_custom_call.1} parent=11 // pred_fallthru
          _
        // Predicated region
        $region21: #{tpu_custom_call.1} parent=11 // pred_check
          %p217 = pneg %p107
        $region22: #{tpu_custom_call.1} parent=11 // pred_check_branch
          %219 = sbr.rel (%p217) target = $region24
        $region23: #{tpu_custom_call.1} parent=11 // pred_region
          _
        $region24: #{tpu_custom_call.1} parent=11 // pred_fallthru
          _
        // Predicated region
        $region25: #{tpu_custom_call.1} parent=11 // pred_check
          %p220 = pneg %p128
        $region26: #{tpu_custom_call.1} parent=11 // pred_check_branch
          %222 = sbr.rel (%p220) target = $region28
        $region27: #{tpu_custom_call.1} parent=11 // pred_region
          _
        $region28: #{tpu_custom_call.1} parent=11 // pred_fallthru
          _
        // Predicated region
        $region29: #{tpu_custom_call.1} parent=11 // pred_check
          %p223 = pneg %p149
        $region30: #{tpu_custom_call.1} parent=11 // pred_check_branch
          %225 = sbr.rel (%p223) target = $region32
        $region31: #{tpu_custom_call.1} parent=11 // pred_region
          _
        $region32: #{tpu_custom_call.1} parent=11 // pred_fallthru
          _
        // Predicated region
        $region33: #{tpu_custom_call.1} parent=11 // pred_check
          %p226 = pneg %p170
        $region34: #{tpu_custom_call.1} parent=11 // pred_check_branch
          %228 = sbr.rel (%p226) target = $region36
        $region35: #{tpu_custom_call.1} parent=11 // pred_region
          _
        $region36: #{tpu_custom_call.1} parent=11 // pred_fallthru
          _
      $region12: #{tpu_custom_call.1} parent=5 // pred_fallthru
        _
      %p229 = scmp.lt.s32.totalorder %s18, 8
      // Predicated region
      $region37: #{tpu_custom_call.1} parent=5 // pred_check
        %p230 = pneg %p229
      $region38: #{tpu_custom_call.1} parent=5 // pred_check_branch
        %232 = sbr.rel (%p230) target = $region40
      $region39: #{tpu_custom_call.1} parent=5 // pred_region
        // Predicated region
        $region41: #{tpu_custom_call.1} parent=39 // pred_check
          %p233 = pneg %p38
        $region42: #{tpu_custom_call.1} parent=39 // pred_check_branch
          %235 = sbr.rel (%p233) target = $region44
        $region43: #{tpu_custom_call.1} parent=39 // pred_region
          %s236 = smul.u32 16, %s18
          %s237 = ssub.s32 125, %s236
          %p238 = scmp.lt.s32.totalorder %s237, 16
          %s239 = scalar_select %p238, %s237, 16
          %s240 = smul.u32 8, %s239
          %p241 = scmp.lt.s32.totalorder %s236, 124
          %s242 = scalar_select %p241, %s236, 124
          %s243 = smul.addr %s242, 8
          %s244 = scalar_lea.vmem %s0, %s243
          %s245 = smul.u32 16, %s18
          %s246 = ssub.s32 125, %s245
          %p247 = scmp.lt.s32.totalorder %s246, 16
          %s248 = scalar_select %p247, %s246, 16
          %s249 = smul.u32 8, %s248
        $region44: #{tpu_custom_call.1} parent=39 // pred_fallthru
          _
      $region40: #{tpu_custom_call.1} parent=5 // pred_fallthru
        _
      %p250 = scmp.le.s32.totalorder 1, %s18
      %p251 = scmp.lt.s32.totalorder %s18, 9
      %p252 = pnand %p250, %p251
      %p253 = pneg %p252
      // Predicated region
      $region45: #{tpu_custom_call.1} parent=5 // pred_check
        _
      $region46: #{tpu_custom_call.1} parent=5 // pred_check_branch
        %255 = sbr.rel (%p252) target = $region48
      $region47: #{tpu_custom_call.1} parent=5 // pred_region
        %s256 = ssub.s32 %s18, 1
        %s257 = smul.u32 16, %s23
        %s258 = ssub.s32 125, %s257
        %p259 = scmp.lt.s32.totalorder %s258, 16
        %s260 = scalar_select %p259, %s258, 16
        %s261 = smul.u32 8, %s260
        %p262 = scmp.lt.s32.totalorder %s257, 124
        %s263 = scalar_select %p262, %s257, 124
        %s264 = smul.addr %s263, 8
        %s265 = scalar_lea.vmem %s0, %s264
        %p266 = pneg %p44
        %p267 = pneg %p41
        %p268 = pneg %p65
        %p269 = pneg %p62
        %p270 = pneg %p86
        %p271 = pneg %p83
        %p272 = pneg %p107
        %p273 = pneg %p104
        %p274 = pneg %p128
        %p275 = pneg %p125
        %p276 = pneg %p149
        %p277 = pneg %p146
        %p278 = pneg %p170
        %p279 = pneg %p167
        %p280 = pneg %p196
        %p281 = pneg %p193
        %s282 = sand.u32 %s183, 1
        %s283 = scalar_lea.sflag [#allocation4], %s282
        %s284 = sand.u32 %s183, 1
        %s285 = scalar_lea.vmem [#allocation3], %s284
        %s286 = smul.u32 16, %s23
        %s287 = ssub.s32 125, %s286
        %p288 = scmp.lt.s32.totalorder %s287, 16
        %s289 = scalar_select %p288, %s287, 16
        %s290 = smul.u32 8, %s289
        %p291 = scmp.lt.s32.totalorder %s286, 124
        %s292 = scalar_select %p291, %s286, 124
        %s293 = smul.addr %s292, 8
        %s294 = scalar_lea.vmem %s0, %s293
        %s295 = smul.u32 16, %s23
        %s296 = ssub.s32 125, %s295
        %p297 = scmp.lt.s32.totalorder %s296, 16
        %s298 = scalar_select %p297, %s296, 16
        %s299 = smul.u32 8, %s298
        %v300 = vld [vmem:[%s1] sm:$0xff]
        %v301 = vld [vmem:[%s1 + $0x8] sm:$0xff]
        %v302 = vld [vmem:[%s294] sm:$0xff]
        %v303 = vld [vmem:[%s294 + $0x8] sm:$0xff]
        %v304 = vld [vmem:[%s294 + $0x10] sm:$0xff]
        %v305 = vld [vmem:[%s294 + $0x18] sm:$0xff]
        %v306 = vld [vmem:[%s294 + $0x20] sm:$0xff]
        %v307 = vld [vmem:[%s294 + $0x28] sm:$0xff]
        %v308 = vld [vmem:[%s294 + $0x30] sm:$0xff]
        %v309 = vld [vmem:[%s294 + $0x38] sm:$0xff]
        %v310 = vld [vmem:[%s294 + $0x40] sm:$0xff]
        %v311 = vld [vmem:[%s294 + $0x48] sm:$0xff]
        %v312 = vld [vmem:[%s294 + $0x50] sm:$0xff]
        %v313 = vld [vmem:[%s294 + $0x58] sm:$0xff]
        %v314 = vld [vmem:[%s294 + $0x60] sm:$0xff]
        %v315 = vld [vmem:[%s294 + $0x68] sm:$0xff]
        %v316 = vld [vmem:[%s294 + $0x70] sm:$0xff]
        %v317 = vld [vmem:[%s294 + $0x78] sm:$0xff]
        %v318 = vld [vmem:[%s2] sm:$0xff]
        %v319 = vld [vmem:[%s2 + $0x8] sm:$0xff]
        %321 = vset.pattern.permute.xlu0 0
        %322 = vperm.xlu0 %321, %v318
        %v323 = vpop.permute.xlu0 %322
        %326 = vset.pattern.permute.xlu0 0
        %327 = vperm.xlu0 %326, %v319
        %v328 = vpop.permute.xlu0 %327
        %vm330 = vcmask 15360
        %v332 = vsel %vm330, %v300, 0
        %v335 = vsel %vm330, %v301, 0
        %v338 = vsel %vm330, %v302, 0
        %v341 = vsel %vm330, %v303, 0
        %v344 = vsel %vm330, %v304, 0
        %v347 = vsel %vm330, %v305, 0
        %v350 = vsel %vm330, %v306, 0
        %v353 = vsel %vm330, %v307, 0
        %v356 = vsel %vm330, %v308, 0
        %v359 = vsel %vm330, %v309, 0
        %v362 = vsel %vm330, %v310, 0
        %v365 = vsel %vm330, %v311, 0
        %v368 = vsel %vm330, %v312, 0
        %v371 = vsel %vm330, %v313, 0
        %v374 = vsel %vm330, %v314, 0
        %v377 = vsel %vm330, %v315, 0
        %v380 = vsel %vm330, %v316, 0
        %v383 = vsel %vm330, %v317, 0
        %385 = vmatpush.xpose.msra.mxu0 %v383
        %386 = vmatpush.xpose.msra.mxu0 %v380
        %387 = vmatpush.xpose.msra.mxu0 %v377
        %388 = vmatpush.xpose.msra.mxu0 %v374
        %389 = vmatpush.xpose.msra.mxu0 %v371
        %390 = vmatpush.xpose.msra.mxu0 %v368
        %391 = vmatpush.xpose.msra.mxu0 %v365
        %392 = vmatpush.xpose.msra.mxu0 %v362
        %393 = vmatpush.xpose.msra.mxu0 %v359
        %394 = vmatpush.xpose.msra.mxu0 %v356
        %395 = vmatpush.xpose.msra.mxu0 %v353
        %396 = vmatpush.xpose.msra.mxu0 %v350
        %397 = vmatpush.xpose.msra.mxu0 %v347
        %398 = vmatpush.xpose.msra.mxu0 %v344
        %399 = vmatpush.xpose.msra.mxu0 %v341
        %400 = vmatpush.xpose.msra.mxu0 %v338
        %401 = vmatmul.f32.gmra.mxu0 %v332
        %v402 = vpop.f32.mrf.mxu0
        %v403 = vadd.f32 %v323, %v402
        %404 = vmatmul.f32.gmra.mxu0 %v335
        %v405 = vpop.f32.mrf.mxu0
        %v406 = vadd.f32 %v328, %v405
        %407 = vdwg.mxu0
        %v408 = vmax.f32 %v403, 0.0
        %v409 = vmax.f32 %v406, 0.0
        %v410 = vld [vmem:[%s3] sm:$0xff]
        %v411 = vld [vmem:[%s3 + $0x8] sm:$0xff]
        %v412 = vld [vmem:[%s4] sm:$0xff]
        %v413 = vld [vmem:[%s4 + $0x8] sm:$0xff]
        %415 = vset.pattern.permute.xlu0 0
        %416 = vperm.xlu0 %415, %v412
        %v417 = vpop.permute.xlu0 %416
        %420 = vset.pattern.permute.xlu0 0
        %421 = vperm.xlu0 %420, %v413
        %v422 = vpop.permute.xlu0 %421
        %vm424 = vcmask 130048
        %v426 = vsel %vm424, %v410, 0
        %v429 = vsel %vm424, %v411, 0
        %431 = vmatpush.msra.mxu0 0.0
        %432 = vmatpush.msra.mxu0 0.0
        %433 = vmatpush.msra.mxu0 0.0
        %434 = vmatpush.msra.mxu0 0.0
        %435 = vmatpush.msra.mxu0 0.0
        %436 = vmatpush.msra.mxu0 0.0
        %437 = vmatpush.msra.mxu0 0.0
        %438 = vmatpush.msra.mxu0 0.0
        %439 = vmatpush.msra.mxu0 0.0
        %440 = vmatpush.msra.mxu0 0.0
        %441 = vmatpush.msra.mxu0 0.0
        %442 = vmatpush.msra.mxu0 0.0
        %443 = vmatpush.msra.mxu0 0.0
        %444 = vmatpush.msra.mxu0 0.0
        %445 = vmatpush.msra.mxu0 %v409
        %446 = vmatpush.msra.mxu0 %v408
        %447 = vmatmul.f32.gmra.mxu0 %v426
        %v448 = vpop.f32.mrf.mxu0
        %v449 = vadd.f32 %v417, %v448
        %450 = vmatmul.f32.gmra.mxu0 %v429
        %v451 = vpop.f32.mrf.mxu0
        %v452 = vadd.f32 %v422, %v451
        %453 = vdwg.mxu0
        %v454 = vmax.f32 %v449, 0.0
        %v455 = vmax.f32 %v452, 0.0
        %v456 = vadd.f32 %v408, %v454
        %v457 = vadd.f32 %v409, %v455
        %s458 = scalar_lea.vmem %s3, 16
        %v459 = vld [vmem:[%s458] sm:$0xff]
        %v460 = vld [vmem:[%s458 + $0x8] sm:$0xff]
        %s461 = scalar_lea.vmem %s4, 16
        %v462 = vld [vmem:[%s461] sm:$0xff]
        %v463 = vld [vmem:[%s461 + $0x8] sm:$0xff]
        %465 = vset.pattern.permute.xlu0 0
        %466 = vperm.xlu0 %465, %v462
        %v467 = vpop.permute.xlu0 %466
        %470 = vset.pattern.permute.xlu0 0
        %471 = vperm.xlu0 %470, %v463
        %v472 = vpop.permute.xlu0 %471
        %v475 = vsel %vm424, %v459, 0
        %v478 = vsel %vm424, %v460, 0
        %480 = vmatpush.msra.mxu0 0.0
        %481 = vmatpush.msra.mxu0 0.0
        %482 = vmatpush.msra.mxu0 0.0
        %483 = vmatpush.msra.mxu0 0.0
        %484 = vmatpush.msra.mxu0 0.0
        %485 = vmatpush.msra.mxu0 0.0
        %486 = vmatpush.msra.mxu0 0.0
        %487 = vmatpush.msra.mxu0 0.0
        %488 = vmatpush.msra.mxu0 0.0
        %489 = vmatpush.msra.mxu0 0.0
        %490 = vmatpush.msra.mxu0 0.0
        %491 = vmatpush.msra.mxu0 0.0
        %492 = vmatpush.msra.mxu0 0.0
        %493 = vmatpush.msra.mxu0 0.0
        %494 = vmatpush.msra.mxu0 %v457
        %495 = vmatpush.msra.mxu0 %v456
        %496 = vmatmul.f32.gmra.mxu0 %v475
        %v497 = vpop.f32.mrf.mxu0
        %v498 = vadd.f32 %v467, %v497
        %499 = vmatmul.f32.gmra.mxu0 %v478
        %v500 = vpop.f32.mrf.mxu0
        %v501 = vadd.f32 %v472, %v500
        %502 = vdwg.mxu0
        %v503 = vmax.f32 %v498, 0.0
        %v504 = vmax.f32 %v501, 0.0
        %v505 = vadd.f32 %v456, %v503
        %v506 = vadd.f32 %v457, %v504
        %s507 = scalar_lea.vmem %s3, 32
        %v508 = vld [vmem:[%s507] sm:$0xff]
        %v509 = vld [vmem:[%s507 + $0x8] sm:$0xff]
        %s510 = scalar_lea.vmem %s4, 32
        %v511 = vld [vmem:[%s510] sm:$0xff]
        %v512 = vld [vmem:[%s510 + $0x8] sm:$0xff]
        %514 = vset.pattern.permute.xlu0 0
        %515 = vperm.xlu0 %514, %v511
        %v516 = vpop.permute.xlu0 %515
        %519 = vset.pattern.permute.xlu0 0
        %520 = vperm.xlu0 %519, %v512
        %v521 = vpop.permute.xlu0 %520
        %v524 = vsel %vm424, %v508, 0
        %v527 = vsel %vm424, %v509, 0
        %529 = vmatpush.msra.mxu0 0.0
        %530 = vmatpush.msra.mxu0 0.0
        %531 = vmatpush.msra.mxu0 0.0
        %532 = vmatpush.msra.mxu0 0.0
        %533 = vmatpush.msra.mxu0 0.0
        %534 = vmatpush.msra.mxu0 0.0
        %535 = vmatpush.msra.mxu0 0.0
        %536 = vmatpush.msra.mxu0 0.0
        %537 = vmatpush.msra.mxu0 0.0
        %538 = vmatpush.msra.mxu0 0.0
        %539 = vmatpush.msra.mxu0 0.0
        %540 = vmatpush.msra.mxu0 0.0
        %541 = vmatpush.msra.mxu0 0.0
        %542 = vmatpush.msra.mxu0 0.0
        %543 = vmatpush.msra.mxu0 %v506
        %544 = vmatpush.msra.mxu0 %v505
        %545 = vmatmul.f32.gmra.mxu0 %v524
        %v546 = vpop.f32.mrf.mxu0
        %v547 = vadd.f32 %v516, %v546
        %548 = vmatmul.f32.gmra.mxu0 %v527
        %v549 = vpop.f32.mrf.mxu0
        %v550 = vadd.f32 %v521, %v549
        %551 = vdwg.mxu0
        %v552 = vmax.f32 %v547, 0.0
        %v553 = vmax.f32 %v550, 0.0
        %v554 = vadd.f32 %v505, %v552
        %v555 = vadd.f32 %v506, %v553
        %s556 = scalar_lea.vmem %s3, 48
        %v557 = vld [vmem:[%s556] sm:$0xff]
        %v558 = vld [vmem:[%s556 + $0x8] sm:$0xff]
        %s559 = scalar_lea.vmem %s4, 48
        %v560 = vld [vmem:[%s559] sm:$0xff]
        %v561 = vld [vmem:[%s559 + $0x8] sm:$0xff]
        %563 = vset.pattern.permute.xlu0 0
        %564 = vperm.xlu0 %563, %v560
        %v565 = vpop.permute.xlu0 %564
        %568 = vset.pattern.permute.xlu0 0
        %569 = vperm.xlu0 %568, %v561
        %v570 = vpop.permute.xlu0 %569
        %v573 = vsel %vm424, %v557, 0
        %v576 = vsel %vm424, %v558, 0
        %578 = vmatpush.msra.mxu0 0.0
        %579 = vmatpush.msra.mxu0 0.0
        %580 = vmatpush.msra.mxu0 0.0
        %581 = vmatpush.msra.mxu0 0.0
        %582 = vmatpush.msra.mxu0 0.0
        %583 = vmatpush.msra.mxu0 0.0
        %584 = vmatpush.msra.mxu0 0.0
        %585 = vmatpush.msra.mxu0 0.0
        %586 = vmatpush.msra.mxu0 0.0
        %587 = vmatpush.msra.mxu0 0.0
        %588 = vmatpush.msra.mxu0 0.0
        %589 = vmatpush.msra.mxu0 0.0
        %590 = vmatpush.msra.mxu0 0.0
        %591 = vmatpush.msra.mxu0 0.0
        %592 = vmatpush.msra.mxu0 %v555
        %593 = vmatpush.msra.mxu0 %v554
        %594 = vmatmul.f32.gmra.mxu0 %v573
        %v595 = vpop.f32.mrf.mxu0
        %v596 = vadd.f32 %v565, %v595
        %597 = vmatmul.f32.gmra.mxu0 %v576
        %v598 = vpop.f32.mrf.mxu0
        %v599 = vadd.f32 %v570, %v598
        %600 = vdwg.mxu0
        %v601 = vmax.f32 %v596, 0.0
        %v602 = vmax.f32 %v599, 0.0
        %v603 = vadd.f32 %v554, %v601
        %v604 = vadd.f32 %v555, %v602
        %v605 = vld [vmem:[%s5] sm:$0xff]
        %v606 = vld [vmem:[%s5 + $0x8] sm:$0xff]
        %608 = vset.pattern.permute.xlu0 0
        %609 = vperm.xlu0 %608, %v605
        %v610 = vpop.permute.xlu0 %609
        %613 = vset.pattern.permute.xlu0 0
        %614 = vperm.xlu0 %613, %v606
        %v615 = vpop.permute.xlu0 %614
        %v617 = vmul.f32 %v610, %v603
        %v618 = vmul.f32 %v615, %v604
        %v619 = vadd.f32 %v617, %v618
        %v620 = vrot.slane %v619, 4
        %v621 = vadd.f32 %v619, %v620
        %v622 = vrot.slane %v621, 2
        %v623 = vadd.f32 %v621, %v622
        %v624 = vrot.slane %v623, 1
        %v625 = vadd.f32 %v623, %v624
        %v626 = vld [vmem:[#allocation2] sm:$0x1]
        %628 = vset.pattern.permute.xlu0 0
        %629 = vperm.xlu0 %628, %v626
        %v630 = vpop.permute.xlu0 %629
        %v632 = vperm.slane %v630, 0
        %v633 = vadd.f32 %v625, %v632
        %634 = vst [vmem:[%s285] sm:$0x1] %v633
        %s635 = sand.u32 %s183, 1
        %s636 = scalar_lea.sflag [#allocation4], %s635
        %s637 = sand.u32 %s183, 1
        %s638 = scalar_lea.vmem [#allocation3], %s637
        // Predicated region
        $region49: #{tpu_custom_call.1} parent=47 // pred_check
          %p639 = pneg %p193
        $region50: #{tpu_custom_call.1} parent=47 // pred_check_branch
          %641 = sbr.rel (%p639) target = $region52
        $region51: #{tpu_custom_call.1} parent=47 // pred_region
          %643 = vsyncadd %s636, 0
          %s644 = scalar_lea.hbm %s7, %s23
          %s646 = sshll.u32 %s638, 4
          %s647 = int_to_ptr.vmem [resolvable:$true] %s646
          %s648 = sshll.u32 %s644, 4
          %s649 = int_to_ptr.hbm [resolvable:$true] %s648
          %651 = dma.vmem_to_hbm [thread:$0]  %s647, 16, %s649, %s636
        $region52: #{tpu_custom_call.1} parent=47 // pred_fallthru
          _
      $region48: #{tpu_custom_call.1} parent=5 // pred_fallthru
        _
      %p652 = scmp.le.s32.totalorder 2, %s18
      // Predicated region
      $region53: #{tpu_custom_call.1} parent=5 // pred_check
        %p653 = pneg %p652
      $region54: #{tpu_custom_call.1} parent=5 // pred_check_branch
        %655 = sbr.rel (%p653) target = $region56
      $region55: #{tpu_custom_call.1} parent=5 // pred_region
        %s656 = ssub.s32 %s18, 2
        // Predicated region
        $region57: #{tpu_custom_call.1} parent=55 // pred_check
          %p657 = pneg %p199
        $region58: #{tpu_custom_call.1} parent=55 // pred_check_branch
          %659 = sbr.rel (%p657) target = $region60
        $region59: #{tpu_custom_call.1} parent=55 // pred_region
          %s660 = sand.u32 %s184, 1
          %s661 = scalar_lea.sflag [#allocation4], %s660
          %s662 = sand.u32 %s184, 1
          %s663 = scalar_lea.vmem [#allocation3], %s662
          %665 = dma.done %s661, 16
        $region60: #{tpu_custom_call.1} parent=55 // pred_fallthru
          _
      $region56: #{tpu_custom_call.1} parent=5 // pred_fallthru
        _
    $region6: #{tpu_custom_call.1} parent=1 // loop_footer
      %s22 = sadd.s32 1, %s18
    $region7: #{tpu_custom_call.1} parent=1 // loop_footer_branch
      %17 = sbr.rel target = $region3
    $region8: #{tpu_custom_call.1} parent=1 // loop_exit
      _
    %666 = vsyncpa [#allocation4], 1
    %s667 = scalar_lea.sflag [#allocation4], 1
    %668 = vsyncpa %s667, 1

</llo_original>
